<compile_context>
chip_gen: v7x
topology: tpu7x:2x2x1
jax: 0.10.0
libtpu: 0.0.40
codegen_flags: <defaults>
</compile_context>

<pallas_src>
import jax
import jax.numpy as jnp
from jax.experimental import pallas as pl
from jax.experimental.pallas import tpu as pltpu

MAX_LENGTH = 77      # self.max_length in the torch module
CLS_ID = 101
SEP_ID = 102
PAD_ID = 0
LANE_PAD = 128       # in-kernel staging width (one lane)

# The kernel places [SEP] at column <= MAX_LENGTH-1 and stages ids in a
# single 128-lane tile; a future MAX_LENGTH > 128 would silently truncate.
assert MAX_LENGTH <= LANE_PAD


def _pack_kernel(raw_ref, len_ref, out_ref, buf_ref):
    """Truncate + add [CLS]/[SEP] + pad to max_length, fully in-VMEM.

    raw_ref: [TB, Lk]         int32  wordpiece ids (Lk = min(L, 128))
    len_ref: [TB, 1]          int32  number of valid wordpiece ids per row
    out_ref: [TB, MAX_LENGTH] int32  packed token ids
    buf_ref: [TB, LANE_PAD]   int32  VMEM scratch (lane-padded staging tile)
    """
    TB, W = buf_ref.shape
    Lk = raw_ref.shape[1]

    # Lane-pad the raw ids inside VMEM (replaces the old wrapper-side HBM
    # zero-pad copy): zero the staging tile, drop the ids at lane offset 0.
    buf_ref[...] = jnp.zeros_like(buf_ref)
    buf_ref[:, :Lk] = raw_ref[...]
    raw = buf_ref[...]                                      # [TB, 128]

    # Room for [CLS]/[SEP]; clamp negative lengths to 0 (empty string).
    eff = jnp.clip(len_ref[...], 0, MAX_LENGTH - 2)         # [TB, 1]
    pos = jax.lax.broadcasted_iota(jnp.int32, (TB, W), 1)   # column index

    # Shift ids right by one lane so position j holds raw[j-1] (XLU rotate;
    # the wrapped element lands at pos 0 and is overwritten by [CLS]).
    shifted = pltpu.roll(raw, shift=1, axis=1)
    body = jnp.where(pos <= eff, shifted, PAD_ID)           # wordpieces 1..eff
    body = jnp.where(pos == eff + 1, SEP_ID, body)          # [SEP]
    body = jnp.where(pos == 0, CLS_ID, body)                # [CLS]

    # Write the 77-wide output block directly (no post-kernel slice).
    out_ref[...] = body[:, :MAX_LENGTH]


def bert_tokenize_pack(raw_ids, lengths, *, batch_tile=1024):
    """raw_ids: [B, L] int wordpiece ids; lengths: [B] int valid counts.

    Returns [B, MAX_LENGTH] int32 token ids (CLS + truncated ids + SEP + pad).
    """
    B, L = raw_ids.shape
    # Only the first MAX_LENGTH-2 (=75) wordpieces can survive truncation, so
    # DMA at most one lane-width of columns per row.  (Block last dim must be
    # the full extent L, or a multiple of 128.)
    Lk = L if L < LANE_PAD else LANE_PAD
    # Batch tile: full extent when small, else a multiple-of-8 tile that keeps
    # VMEM bounded and enables double-buffered pipelining.
    TB = B if B <= batch_tile else batch_tile

    raw = raw_ids.astype(jnp.int32)
    lens = lengths.reshape(B, 1).astype(jnp.int32)

    return pl.pallas_call(
        _pack_kernel,
        out_shape=jax.ShapeDtypeStruct((B, MAX_LENGTH), jnp.int32),
        grid=(pl.cdiv(B, TB),),
        in_specs=[
            pl.BlockSpec((TB, Lk), lambda i: (i, 0)),
            pl.BlockSpec((TB, 1), lambda i: (i, 0)),
        ],
        out_specs=pl.BlockSpec((TB, MAX_LENGTH), lambda i: (i, 0)),
        scratch_shapes=[pltpu.VMEM((TB, LANE_PAD), jnp.int32)],
        compiler_params=pltpu.CompilerParams(
            dimension_semantics=("parallel",)),   # lets v7x's 2 TCs split B
    )(raw, lens)


class BERTTokenizerPallas:
    """Mirrors BERTTokenizer.forward / .encode / .decode semantics."""

    def __init__(self, vq_interface=True, max_length=MAX_LENGTH):
        self.vq_interface = vq_interface
        self.max_length = max_length

    def __call__(self, raw_ids, lengths):
        return bert_tokenize_pack(raw_ids, lengths)

    def encode(self, raw_ids, lengths):
        tokens = self(raw_ids, lengths)
        if not self.vq_interface:
            return tokens
        return None, None, [None, None, tokens]

    def decode(self, text):
        return text


def _reference(raw_ids, lengths):
    import numpy as np
    raw = np.asarray(raw_ids)
    lens = np.asarray(lengths)
    B = raw.shape[0]
    out = np.zeros((B, MAX_LENGTH), np.int32)
    for b in range(B):
        eff = int(min(max(int(lens[b]), 0), MAX_LENGTH - 2))
        out[b, 0] = CLS_ID
        out[b, 1:1 + eff] = raw[b, :eff]
        out[b, 1 + eff] = SEP_ID
    return out


if __name__ == "__main__":
    key = jax.random.PRNGKey(0)
    k1, k2, k3 = jax.random.split(key, 3)
    tok = BERTTokenizerPallas(vq_interface=True)

    # Case 1: small batch, short sequences; includes an empty-string row.
    B, L = 4, 16
    raw_ids = jax.random.randint(k1, (B, L), 1000, 30000, dtype=jnp.int32)
    lengths = jax.random.randint(k2, (B,), 1, L + 1, dtype=jnp.int32)
    lengths = lengths.at[0].set(0)
    tokens = jax.block_until_ready(tok(raw_ids, lengths))
    ref = _reference(raw_ids, lengths)
    assert tokens.shape == (B, MAX_LENGTH)
    assert tokens.dtype == jnp.int32
    assert (jax.device_get(tokens) == ref).all()

    # Case 2: sequences longer than max_length-2 -> exercises truncation.
    B2, L2 = 2, 96
    raw_ids2 = jax.random.randint(k3, (B2, L2), 1000, 30000, dtype=jnp.int32)
    lengths2 = jnp.array([96, 40], dtype=jnp.int32)
    tokens2 = jax.block_until_ready(tok(raw_ids2, lengths2))
    ref2 = _reference(raw_ids2, lengths2)
    assert tokens2.shape == (B2, MAX_LENGTH)
    assert (jax.device_get(tokens2) == ref2).all()

    # vq_interface path, as in the torch module's encode()
    _, _, (_, _, tokens3) = tok.encode(raw_ids, lengths)
    jax.block_until_ready(tokens3)

    print("KERNEL_OK")
</pallas_src>

<mosaic_0001>
module attributes {stable_mosaic.version = 11 : i64} {
  func.func @_pack_kernel(%arg0: i32, %arg1: memref<4x16xi32, #tpu.memory_space<vmem>>, %arg2: memref<4x1xi32, #tpu.memory_space<vmem>>, %arg3: memref<4x77xi32, #tpu.memory_space<vmem>>, %arg4: memref<4x128xi32, #tpu.memory_space<vmem>>) attributes {dimension_semantics = [#tpu.dimension_semantics<parallel>], iteration_bounds = array<i64: 1>, scalar_prefetch = 0 : i64, scratch_operands = 1 : i64, tpu.core_type = #tpu.core_type<tc>, window_params = [{transform_indices = @transform_0, window_bounds = array<i64: 4, 16>}, {transform_indices = @transform_1, window_bounds = array<i64: 4, 1>}, {transform_indices = @transform_2, window_bounds = array<i64: 4, 77>}]} {
    %c0_i32 = arith.constant 0 : i32
    %0 = vector.broadcast %c0_i32 : i32 to vector<4x128xi32>
    %c0 = arith.constant 0 : index
    %c0_0 = arith.constant 0 : index
    %1 = vector.load %arg4[%c0, %c0_0] : memref<4x128xi32, #tpu.memory_space<vmem>>, vector<4x128xi32>
    tpu.vector_store %arg4[%c0, %c0_0], %0 {strides = array<i32>} : memref<4x128xi32, #tpu.memory_space<vmem>>, vector<4x128xi32>,
    %c0_1 = arith.constant 0 : index
    %c0_2 = arith.constant 0 : index
    %2 = vector.load %arg1[%c0_1, %c0_2] : memref<4x16xi32, #tpu.memory_space<vmem>>, vector<4x16xi32>
    %c0_3 = arith.constant 0 : index
    %c0_4 = arith.constant 0 : index
    %3 = vector.load %arg4[%c0_3, %c0_4] : memref<4x128xi32, #tpu.memory_space<vmem>>, vector<4x16xi32>
    tpu.vector_store %arg4[%c0_3, %c0_4], %2 {strides = array<i32>} : memref<4x128xi32, #tpu.memory_space<vmem>>, vector<4x16xi32>,
    %c0_5 = arith.constant 0 : index
    %c0_6 = arith.constant 0 : index
    %4 = vector.load %arg4[%c0_5, %c0_6] : memref<4x128xi32, #tpu.memory_space<vmem>>, vector<4x128xi32>
    %c0_7 = arith.constant 0 : index
    %c0_8 = arith.constant 0 : index
    %5 = vector.load %arg2[%c0_7, %c0_8] : memref<4x1xi32, #tpu.memory_space<vmem>>, vector<4x1xi32>
    %c0_i32_9 = arith.constant 0 : i32
    %c75_i32 = arith.constant 75 : i32
    %6 = vector.broadcast %c0_i32_9 : i32 to vector<4x1xi32>
    %7 = arith.maxsi %6, %5 : vector<4x1xi32>
    %8 = vector.broadcast %c75_i32 : i32 to vector<4x1xi32>
    %9 = arith.minsi %8, %7 : vector<4x1xi32>
    %10 = tpu.iota {dimensions = array<i32: 1>} : vector<4x128xi32>
    %c1_i32 = arith.constant 1 : i32
    %11 = tpu.dynamic_rotate %4 by %c1_i32 dim 1 : vector<4x128xi32>, i32 -> vector<4x128xi32>
    %12 = vector.broadcast %9 : vector<4x1xi32> to vector<4x128xi32>
    %13 = arith.cmpi sle, %10, %12 : vector<4x128xi32>
    %c0_i32_10 = arith.constant 0 : i32
    %14 = vector.broadcast %c0_i32_10 : i32 to vector<4x128xi32>
    %15 = arith.select %13, %11, %14 : vector<4x128xi1>, vector<4x128xi32>
    %c1_i32_11 = arith.constant 1 : i32
    %16 = vector.broadcast %c1_i32_11 : i32 to vector<4x1xi32>
    %17 = arith.addi %9, %16 : vector<4x1xi32>
    %18 = vector.broadcast %17 : vector<4x1xi32> to vector<4x128xi32>
    %19 = arith.cmpi eq, %10, %18 : vector<4x128xi32>
    %c102_i32 = arith.constant 102 : i32
    %20 = vector.broadcast %c102_i32 : i32 to vector<4x128xi32>
    %21 = arith.select %19, %20, %15 : vector<4x128xi1>, vector<4x128xi32>
    %c0_i32_12 = arith.constant 0 : i32
    %22 = vector.broadcast %c0_i32_12 : i32 to vector<4x128xi32>
    %23 = arith.cmpi eq, %10, %22 : vector<4x128xi32>
    %c101_i32 = arith.constant 101 : i32
    %24 = vector.broadcast %c101_i32 : i32 to vector<4x128xi32>
    %25 = arith.select %23, %24, %21 : vector<4x128xi1>, vector<4x128xi32>
    %26 = vector.extract_strided_slice %25 {offsets = [0, 0], sizes = [4, 77], strides = [1, 1]} : vector<4x128xi32> to vector<4x77xi32>
    %c0_13 = arith.constant 0 : index
    %c0_14 = arith.constant 0 : index
    %27 = vector.load %arg3[%c0_13, %c0_14] : memref<4x77xi32, #tpu.memory_space<vmem>>, vector<4x77xi32>
    tpu.vector_store %arg3[%c0_13, %c0_14], %26 {strides = array<i32>} : memref<4x77xi32, #tpu.memory_space<vmem>>, vector<4x77xi32>,
    return
  }
  func.func @transform_0(%arg0: i32) -> (i32, i32) {
    %c0_i32 = arith.constant 0 : i32
    %c0_i32_0 = arith.constant 0 : i32
    return %arg0, %c0_i32 : i32, i32
  }
  func.func @transform_1(%arg0: i32) -> (i32, i32) {
    %c0_i32 = arith.constant 0 : i32
    %c0_i32_0 = arith.constant 0 : i32
    return %arg0, %c0_i32 : i32, i32
  }
  func.func @transform_2(%arg0: i32) -> (i32, i32) {
    %c0_i32 = arith.constant 0 : i32
    %c0_i32_0 = arith.constant 0 : i32
    return %arg0, %c0_i32 : i32, i32
  }
}

</mosaic_0001>

<llo_original>
// kernel: tpu_custom_call.1
$region0: #{tpu_custom_call.1}
  #allocation0 [shape = 'u32[]', space=smem, size = 0x4, offset = 0x4, fixed_abs, tag = 'smem constant byte address 0x4 - core index']
  #allocation1 [shape = 'u32[144,128]{1,0:T(1,128)}', space=vmem, size = 0x12000, scoped, tag = 'internal scratch']
  #allocation2 [shape = 's32[4,128]{1,0:T(4,128)}', space=vmem, size = 0x800, scoped, tag = 'scratch operand']
  %s0 = inlined_call_operand.vmem [shape: s32[4,16], index: 0, kind: input, shape index: {}]
  %s1 = inlined_call_operand.vmem [shape: s32[4,1], index: 1, kind: input, shape index: {}]
  %s2 = inlined_call_operand.hbm [shape: s32[4,77], index: 2, kind: output, shape index: {}]
  %s3 = sld [smem:[#allocation0]]
  $region18: #{tpu_custom_call.1} parent=0
    _
  %s5 = ssub.s32 1, %s3
  %s6 = scalar_select 0, %s5, %s3
  $region1: #{tpu_custom_call.1} parent=0
    #allocation3 [shape = 'u8[2048]{0}', space=vmem, size = 0x800, scoped, tag = 'output window, operand 0, single buffered']
    #allocation4 [shape = 's32[1]{0}', space=sflag, size = 0x4, scoped, tag = 'scoped memory for tpu_custom_call.1']
    %7 = vsyncpa [#allocation4], 0
    // Predicated region
    $region2: #{tpu_custom_call.1} parent=1 // pred_check
      _
    $region3: #{tpu_custom_call.1} parent=1 // pred_check_branch
      %9 = sbr.rel (0) target = $region5
    $region4: #{tpu_custom_call.1} parent=1 // pred_region
      _
    $region5: #{tpu_custom_call.1} parent=1 // pred_fallthru
      _
    // Predicated region
    $region6: #{tpu_custom_call.1} parent=1 // pred_check
      _
    $region7: #{tpu_custom_call.1} parent=1 // pred_check_branch
      %11 = sbr.rel (0) target = $region9
    $region8: #{tpu_custom_call.1} parent=1 // pred_region
      _
    $region9: #{tpu_custom_call.1} parent=1 // pred_fallthru
      _
    %12 = vst [vmem:[#allocation2] sm:$0xf] 0
    %v13 = vld [vmem:[%s0] sm:$0xf]
    %vm14 = vcmask 125952
    %15 = vst.msk [vmem:[#allocation2] sm:$0xf] %vm14, %v13
    %v16 = vld [vmem:[#allocation2] sm:$0xf]
    %v17 = vld [vmem:[%s1] sm:$0xf]
    %vm18 = vcmp.gt.s32.totalorder %v17, 0
    %v19 = vsel %vm18, %v17, 0
    %vm20 = vcmp.lt.s32.totalorder %v19, 75
    %v21 = vsel %vm20, %v19, 75
    %v22 = vlaneseq
    %v23 = vand.u32 %v22, 127
    %24 = vrot.lane.b32.xlu0 %v16, 1
    %v25 = vpop.permute.xlu0 %24
    %26 = vset.pattern.permute.xlu0 0
    %27 = vperm.xlu0 %26, %v21
    %v28 = vpop.permute.xlu0 %27
    %vm29 = vcmp.le.s32.totalorder %v23, %v28
    %v30 = vsel %vm29, %v25, 0
    %v31 = vadd.s32 %v21, 1
    %32 = vset.pattern.permute.xlu0 0
    %33 = vperm.xlu0 %32, %v31
    %v34 = vpop.permute.xlu0 %33
    %vm35 = vcmp.eq.s32.totalorder %v23, %v34
    %v36 = vsel %vm35, 102, %v30
    %vm37 = vcmp.eq.s32.totalorder %v23, 0
    %v38 = vsel %vm37, 101, %v36
    %vm39 = vcmask 625664
    %40 = vst.msk [vmem:[#allocation3] sm:$0xf] %vm39, %v38
    // Predicated region
    $region10: #{tpu_custom_call.1} parent=1 // pred_check
      _
    $region11: #{tpu_custom_call.1} parent=1 // pred_check_branch
      %42 = sbr.rel (0) target = $region13
    $region12: #{tpu_custom_call.1} parent=1 // pred_region
      %s44 = ssub.s32 64, 64
      %45 = vsyncadd [#allocation4], %s44
      %s47 = sshll.u32 [#allocation3], 4
      %s48 = int_to_ptr.vmem [resolvable:$true] %s47
      %50 = dma.vmem_to_hbm [thread:$0]  %s48, 64, %s2, [#allocation4]
    $region13: #{tpu_custom_call.1} parent=1 // pred_fallthru
      _
    // Predicated region
    $region14: #{tpu_custom_call.1} parent=1 // pred_check
      _
    $region15: #{tpu_custom_call.1} parent=1 // pred_check_branch
      %52 = sbr.rel (0) target = $region17
    $region16: #{tpu_custom_call.1} parent=1 // pred_region
      %53 = dma.done [#allocation4], 64
    $region17: #{tpu_custom_call.1} parent=1 // pred_fallthru
      _
    %54 = vsyncpa [#allocation4], 1

</llo_original>
